<compile_context>
chip_gen: v6e
topology: v6e:2x2x1
jax: 0.10.0
libtpu: 0.0.40
codegen_flags: <defaults>
</compile_context>

<pallas_src>
import functools

import numpy as np

import jax
import jax.numpy as jnp
from jax.experimental import pallas as pl
from jax.experimental.pallas import tpu as pltpu


def _round_up(x, m):
    return (x + m - 1) // m * m


def _interpath_kernel(blk_base_ref,   # SMEM (num_nb,) int32: first edge-block of this node block's segment
                      blk_cnt_ref,    # SMEM (num_nb,) int32: number of edge-blocks in the segment
                      msg_ref,        # VMEM (EB, SDp) bf16 : pre-gathered, pre-weighted per-edge message
                      dst_ref,        # VMEM (1, EB)   int32: destination node id per edge
                      out_ref,        # VMEM (NB, SDp) f32  : resident accumulator for this node block
                      *, NB, EB):
    n = pl.program_id(0)              # node-block index (parallel)
    e = pl.program_id(1)              # edge-block index within this node block's segment (reduction)

    # fn.sum init: zero this output tile unconditionally at the start of the edge loop
    # (also yields zeros for zero-in-degree nodes / empty segments).
    @pl.when(e == 0)
    def _():
        out_ref[...] = jnp.zeros_like(out_ref)

    # Skip blocks past the end of this node block's edge segment.
    @pl.when(e < blk_cnt_ref[n])
    def _():
        # dst one-hot (exact 0/1 in bf16).  Grid-invariant iota; n-dependence goes into
        # the cheap (1, EB) subtraction instead of the (NB, EB) iota.
        local_dst = dst_ref[...] - n * NB                               # (1, EB) int32
        row_ids = jax.lax.broadcasted_iota(jnp.int32, (NB, EB), 0)      # (NB, EB)
        onehot = (row_ids == local_dst).astype(jnp.bfloat16)            # (NB, EB)

        # fn.sum aggregation: one lane-dense bf16 MXU matmul, f32 accumulation.
        out_ref[...] += jnp.dot(onehot, msg_ref[...],
                                preferred_element_type=jnp.float32)


def interpath_forward(feat, pred_flow, order_info, src, dst,
                      *, edge_block=512, node_block=1024):
    N, T, D = feat.shape
    E, S = order_info.shape

    SD = S * D
    SDp = _round_up(SD, 128)                       # lane-dense message width (joint S*D pad)

    EB = min(edge_block, _round_up(max(E, 1), 128))
    NB = max(8, min(node_block, _round_up(N, 8)))
    # Keep >= 2 node blocks so the "parallel" axis can shard across v7x's 2 TensorCores.
    if NB >= 16 and _round_up(N, NB) // NB < 2:
        NB = _round_up(NB // 2, 8)
    Np = _round_up(N, NB)
    num_nb = Np // NB

    Ep = _round_up(E, EB)
    total_blocks = Ep // EB

    f32 = jnp.float32
    bf16 = jnp.bfloat16

    # ---- host-side scheduling (concrete numpy): sort edges by dst, per-node-block segments ----
    dst_np = np.asarray(jax.device_get(dst)).astype(np.int64)
    perm_np = np.argsort(dst_np, kind="stable")
    dst_sorted_np = dst_np[perm_np]

    nb_ids = np.arange(num_nb, dtype=np.int64)
    seg_start = np.searchsorted(dst_sorted_np, nb_ids * NB, side="left")
    seg_end = np.searchsorted(dst_sorted_np, (nb_ids + 1) * NB, side="left")
    blk_lo = seg_start // EB
    blk_hi = -(-seg_end // EB)                                   # ceil div
    blk_cnt_np = np.maximum(blk_hi - blk_lo, 0).astype(np.int32)
    blk_base_np = np.minimum(blk_lo, total_blocks - 1).astype(np.int32)
    max_blocks = int(max(1, blk_cnt_np.max())) if num_nb > 0 else 1

    # ---- host-side data prep: fused src+orderInfo gather, predFlow scaling, bf16 stream ----
    perm = jnp.asarray(perm_np)
    src_s = src[perm]
    dst_s = dst[perm].astype(jnp.int32)
    order_s = order_info[perm].astype(jnp.int32)

    feat_e = jnp.take(feat.astype(f32), src_s, axis=0)                     # (E, T, D)
    gathered = jnp.take_along_axis(feat_e, order_s[..., None], axis=1)     # (E, S, D)
    w_e = pred_flow.reshape(-1).astype(f32)[src_s]                         # (E,)
    msg = (gathered * w_e[:, None, None]).reshape(E, SD).astype(bf16)      # (E, S*D) bf16

    pad_e = Ep - E
    if pad_e:
        msg = jnp.pad(msg, ((0, pad_e), (0, 0)))                 # zero messages -> contribute 0
        dst_s = jnp.pad(dst_s, (0, pad_e), constant_values=N)    # sentinel dst (msg is 0 anyway)
    if SDp != SD:
        msg = jnp.pad(msg, ((0, 0), (0, SDp - SD)))

    dst2 = dst_s.reshape(1, Ep)
    blk_base = jnp.asarray(blk_base_np)
    blk_cnt = jnp.asarray(blk_cnt_np)

    # ---- explicit VMEM budgeting (v7x: 64 MiB physical / 32 MiB scoped default) ----
    vmem_est = (2 * EB * SDp * 2          # double-buffered bf16 msg blocks
                + 2 * 2 * EB * 4          # dst blocks
                + 2 * NB * SDp * 4        # resident f32 accumulator tile (double-buffered)
                + NB * EB * 2             # one-hot intermediate
                + EB * SDp * 4            # slack for intermediates
                + (2 << 20))
    vmem_limit = int(min(64 * 1024 * 1024, max(32 * 1024 * 1024, 2 * vmem_est)))

    def msg_map(n, e, base, cnt):
        return (jnp.minimum(base[n] + e, total_blocks - 1), 0)

    def dst_map(n, e, base, cnt):
        return (0, jnp.minimum(base[n] + e, total_blocks - 1))

    def out_map(n, e, base, cnt):
        return (n, 0)

    out = pl.pallas_call(
        functools.partial(_interpath_kernel, NB=NB, EB=EB),
        out_shape=jax.ShapeDtypeStruct((Np, SDp), jnp.float32),
        grid_spec=pltpu.PrefetchScalarGridSpec(
            num_scalar_prefetch=2,
            grid=(num_nb, max_blocks),
            in_specs=[
                pl.BlockSpec((EB, SDp), msg_map),    # per-edge messages (bf16)
                pl.BlockSpec((1, EB), dst_map),      # per-edge dst ids (int32)
            ],
            out_specs=pl.BlockSpec((NB, SDp), out_map),
        ),
        compiler_params=pltpu.CompilerParams(
            dimension_semantics=("parallel", "arbitrary"),
            vmem_limit_bytes=vmem_limit),
    )(blk_base, blk_cnt, msg, dst2)

    h = out[:N, :SD].reshape(N, S, D)
    # rst.squeeze(dim=1): squeeze only when that axis has size 1 (torch semantics)
    return jnp.squeeze(h, axis=1) if S == 1 else h


def _reference(feat, pred_flow, order_info, src, dst, msg_dtype=jnp.float32):
    N, T, D = feat.shape
    E, S = order_info.shape
    feat_src = feat[src]                                                     # (E, T, D)
    gathered = jnp.take_along_axis(feat_src, order_info[..., None], axis=1)  # (E, S, D)
    m = gathered * pred_flow.reshape(-1)[src][:, None, None]
    m = m.astype(msg_dtype).astype(jnp.float32)
    h = jnp.zeros((N, S, D), jnp.float32).at[dst].add(m)
    return jnp.squeeze(h, axis=1) if S == 1 else h


if __name__ == "__main__":
    key = jax.random.PRNGKey(0)
    k1, k2, k3, k4, k5 = jax.random.split(key, 5)

    # small synthetic graph consistent with the module's forward
    N, T, D = 12, 4, 32     # nodes, positions per node embedding, feature dim
    E, S = 300, 1           # edges, gathered positions per edge (DGL path implies S == 1)

    feat = jax.random.normal(k1, (N, T, D), dtype=jnp.float32)          # srcdata['embedding'/'h']
    pred_flow = jax.random.normal(k2, (N, 1), dtype=jnp.float32)        # srcdata['predFlow']
    order_info = jax.random.randint(k3, (E, S), 0, T, dtype=jnp.int32)  # orderInfo
    src = jax.random.randint(k4, (E,), 0, N, dtype=jnp.int32)           # graph edges (src)
    dst = jax.random.randint(k5, (E,), 0, N, dtype=jnp.int32)           # graph edges (dst)

    ref_bf16 = _reference(feat, pred_flow, order_info, src, dst, msg_dtype=jnp.bfloat16)
    ref_f32 = _reference(feat, pred_flow, order_info, src, dst)

    # default tiles, plus a small-tile config that exercises multiple edge/node blocks
    for eb, nb in ((512, 1024), (128, 8)):
        out = interpath_forward(feat, pred_flow, order_info, src, dst,
                                edge_block=eb, node_block=nb)
        jax.block_until_ready(out)
        assert out.shape == ref_f32.shape, (out.shape, ref_f32.shape)
        # tight check vs. a reference using identically bf16-quantized messages
        assert jnp.allclose(out, ref_bf16, atol=2e-3, rtol=2e-3), (eb, nb)
        # sanity check vs. the full f32 reference (bf16 message stream -> looser tol)
        assert jnp.allclose(out, ref_f32, atol=1e-1, rtol=1e-1), (eb, nb)

    print("KERNEL_OK")
</pallas_src>

<mosaic_0001>
module attributes {stable_mosaic.version = 11 : i64} {
  func.func @_interpath_kernel(%arg0: i32, %arg1: i32, %arg2: memref<2xi32, #tpu.memory_space<smem>>, %arg3: memref<2xi32, #tpu.memory_space<smem>>, %arg4: memref<384x128xbf16, #tpu.memory_space<vmem>>, %arg5: memref<1x384xi32, #tpu.memory_space<vmem>>, %arg6: memref<8x128xf32, #tpu.memory_space<vmem>>) attributes {dimension_semantics = [#tpu.dimension_semantics<parallel>, #tpu.dimension_semantics<arbitrary>], iteration_bounds = array<i64: 2, 1>, scalar_prefetch = 2 : i64, scratch_operands = 0 : i64, tpu.core_type = #tpu.core_type<tc>, window_params = [{transform_indices = @transform_0, window_bounds = array<i64: 384, 128>}, {transform_indices = @transform_1, window_bounds = array<i64: 1, 384>}, {transform_indices = @transform_2, window_bounds = array<i64: 8, 128>}]} {
    %c0_i32 = arith.constant 0 : i32
    %0 = arith.cmpi eq, %arg1, %c0_i32 : i32
    %1 = arith.extui %0 : i1 to i32
    %c0_i32_0 = arith.constant 0 : i32
    %2 = arith.cmpi ne, %1, %c0_i32_0 : i32
    scf.if %2 {
      %cst = arith.constant 0.000000e+00 : f32
      %8 = vector.broadcast %cst : f32 to vector<8x128xf32>
      %c0 = arith.constant 0 : index
      %c0_2 = arith.constant 0 : index
      %9 = vector.load %arg6[%c0, %c0_2] : memref<8x128xf32, #tpu.memory_space<vmem>>, vector<8x128xf32>
      tpu.vector_store %arg6[%c0, %c0_2], %8 {strides = array<i32>} : memref<8x128xf32, #tpu.memory_space<vmem>>, vector<8x128xf32>,
    } else {
    }
    %3 = arith.index_cast %arg0 : i32 to index
    %4 = memref.load %arg3[%3] : memref<2xi32, #tpu.memory_space<smem>>
    %5 = arith.cmpi slt, %arg1, %4 : i32
    %6 = arith.extui %5 : i1 to i32
    %c0_i32_1 = arith.constant 0 : i32
    %7 = arith.cmpi ne, %6, %c0_i32_1 : i32
    scf.if %7 {
      %c0 = arith.constant 0 : index
      %c0_2 = arith.constant 0 : index
      %8 = vector.load %arg5[%c0, %c0_2] : memref<1x384xi32, #tpu.memory_space<vmem>>, vector<1x384xi32>
      %c8_i32 = arith.constant 8 : i32
      %9 = arith.muli %arg0, %c8_i32 : i32
      %10 = vector.broadcast %9 : i32 to vector<1x384xi32>
      %11 = arith.subi %8, %10 : vector<1x384xi32>
      %12 = tpu.iota {dimensions = array<i32: 0>} : vector<8x384xi32>
      %13 = vector.broadcast %11 : vector<1x384xi32> to vector<8x384xi32>
      %14 = arith.cmpi eq, %12, %13 : vector<8x384xi32>
      %15 = arith.extui %14 : vector<8x384xi1> to vector<8x384xi32>
      %16 = arith.sitofp %15 : vector<8x384xi32> to vector<8x384xf32>
      %17 = arith.truncf %16 : vector<8x384xf32> to vector<8x384xbf16>
      %c0_3 = arith.constant 0 : index
      %c0_4 = arith.constant 0 : index
      %18 = vector.load %arg6[%c0_3, %c0_4] : memref<8x128xf32, #tpu.memory_space<vmem>>, vector<8x128xf32>
      %c0_5 = arith.constant 0 : index
      %c0_6 = arith.constant 0 : index
      %19 = vector.load %arg4[%c0_5, %c0_6] : memref<384x128xbf16, #tpu.memory_space<vmem>>, vector<384x128xbf16>
      %cst = arith.constant dense<0.000000e+00> : vector<8x128xf32>
      %20 = tpu.matmul %17, %19, %cst {dimension_numbers = #tpu.dot_dimension_numbers<[1], [0], [0], [1], [0, 0, 1, 1], [], []>} : vector<8x384xbf16>, vector<384x128xbf16>, vector<8x128xf32> -> vector<8x128xf32>
      %21 = arith.addf %18, %20 : vector<8x128xf32>
      %c0_7 = arith.constant 0 : index
      %c0_8 = arith.constant 0 : index
      %22 = vector.load %arg6[%c0_7, %c0_8] : memref<8x128xf32, #tpu.memory_space<vmem>>, vector<8x128xf32>
      tpu.vector_store %arg6[%c0_7, %c0_8], %21 {strides = array<i32>} : memref<8x128xf32, #tpu.memory_space<vmem>>, vector<8x128xf32>,
    } else {
    }
    return
  }
  func.func @transform_0(%arg0: i32, %arg1: i32, %arg2: memref<2xi32, #tpu.memory_space<smem>>, %arg3: memref<2xi32, #tpu.memory_space<smem>>) -> (i32, i32) {
    %0 = arith.index_cast %arg0 : i32 to index
    %1 = memref.load %arg2[%0] : memref<2xi32, #tpu.memory_space<smem>>
    %2 = arith.addi %1, %arg1 : i32
    %c0_i32 = arith.constant 0 : i32
    %3 = arith.minsi %2, %c0_i32 : i32
    %c0_i32_0 = arith.constant 0 : i32
    %c0_i32_1 = arith.constant 0 : i32
    return %3, %c0_i32_0 : i32, i32
  }
  func.func @transform_1(%arg0: i32, %arg1: i32, %arg2: memref<2xi32, #tpu.memory_space<smem>>, %arg3: memref<2xi32, #tpu.memory_space<smem>>) -> (i32, i32) {
    %0 = arith.index_cast %arg0 : i32 to index
    %1 = memref.load %arg2[%0] : memref<2xi32, #tpu.memory_space<smem>>
    %2 = arith.addi %1, %arg1 : i32
    %c0_i32 = arith.constant 0 : i32
    %3 = arith.minsi %2, %c0_i32 : i32
    %c0_i32_0 = arith.constant 0 : i32
    %c0_i32_1 = arith.constant 0 : i32
    return %c0_i32_0, %3 : i32, i32
  }
  func.func @transform_2(%arg0: i32, %arg1: i32, %arg2: memref<2xi32, #tpu.memory_space<smem>>, %arg3: memref<2xi32, #tpu.memory_space<smem>>) -> (i32, i32) {
    %c0_i32 = arith.constant 0 : i32
    %c0_i32_0 = arith.constant 0 : i32
    return %arg0, %c0_i32 : i32, i32
  }
}

</mosaic_0001>

<llo_original>
// kernel: tpu_custom_call.1
$region0: #{tpu_custom_call.1}
  #allocation0 [shape = 'u32[]', space=smem, size = 0x4, offset = 0x4, fixed_abs, tag = 'smem constant byte address 0x4 - core index']
  #allocation1 [shape = 'u32[144,128]{1,0:T(1,128)}', space=vmem, size = 0x12000, scoped, tag = 'internal scratch']
  #allocation2 [shape = 's32[1]{0}', space=sflag, size = 0x4, scoped, tag = 'scoped memory for tpu_custom_call.1']
  #allocation3 [shape = 'u8[512]{0}', space=smem, size = 0x200, scoped, tag = 'prefetched SMEM operand 0']
  #allocation4 [shape = 'u8[512]{0}', space=smem, size = 0x200, scoped, tag = 'prefetched SMEM operand 1']
  %s0 = inlined_call_operand.hbm [shape: s32[2], index: 0, kind: input, shape index: {}]
  %s1 = inlined_call_operand.vmem [shape: s32[2], index: 1, kind: input, shape index: {}]
  %s2 = inlined_call_operand.hbm [shape: bf16[384,128], index: 2, kind: input, shape index: {}]
  %s3 = inlined_call_operand.vmem [shape: s32[1,384], index: 3, kind: input, shape index: {}]
  %s4 = inlined_call_operand.hbm [shape: f32[16,128], index: 4, kind: output, shape index: {}]
  %s5 = sld [smem:[#allocation0]]
  $region53: #{tpu_custom_call.1} parent=0
    _
  %s7 = ssub.s32 1, %s5
  %s8 = scalar_select 0, %s7, %s5
  %10 = dma.hbm_to_smem %s0, 16, [#allocation3], [#allocation2]
  %s11 = sshll.u32 %s1, 4
  %s12 = int_to_ptr.vmem [resolvable:$true] %s11
  %14 = dma.vmem_to_smem %s12, 16, [#allocation4], [#allocation2]
  %15 = dma.done [#allocation2], 32
  %16 = sfence
  $region1: #{tpu_custom_call.1} parent=0
    #allocation5 [shape = 'u8[196608]{0}', space=vmem, size = 0x30000, scoped, tag = 'input window, operand 2']
    #allocation6 [shape = 's32[2]{0}', space=sflag, size = 0x8, scoped, tag = 'scoped memory for tpu_custom_call.1']
    #allocation7 [shape = 's32[2]{0}', space=sflag, size = 0x8, scoped, tag = 'scoped memory for tpu_custom_call.1']
    #allocation8 [shape = 'u8[8192]{0}', space=vmem, size = 0x2000, scoped, tag = 'output window, operand 0']
    %17 = vsyncpa [#allocation6], 0
    %s18 = scalar_lea.sflag [#allocation6], 1
    %19 = vsyncpa %s18, 0
    %20 = vsyncpa [#allocation7], 0
    %s21 = scalar_lea.sflag [#allocation7], 1
    %22 = vsyncpa %s21, 0
    loop: start=0, step=1, limit=4
    $region2: #{tpu_custom_call.1} parent=1 // loop_pre_header
      _
    $region3: #{tpu_custom_call.1} parent=1 // loop_header
      %s24 = sphi 0, %s28
      %p25 = scmp.ge.s32.totalorder %s24, 4
      %s31 = sphi 0, %s43
      %s32 = sphi 0, %s39
      %s33 = sphi 0, %s31
      %s34 = sphi 0, %s32
      %s35 = sphi 0, %s33
      %s36 = sphi 0, %s34
      %s54 = sphi 0, %s56
      %s57 = sphi 0, %s54
      %s58 = sphi 0, %s57
      %s74 = sphi 0, %s58
      %s88 = sphi 0, %s90
      %s91 = sphi 0, %s88
      %s92 = sphi 0, %s91
      %s108 = sphi 0, %s92
      %s114 = sphi 0, %s116
      %s117 = sphi 0, %s114
      %s118 = sphi 0, %s117
      %s134 = sphi 0, %s118
    $region4: #{tpu_custom_call.1} parent=1 // loop_header_branch
      %27 = sbr.rel (%p25) target = $region8
    $region5: #{tpu_custom_call.1} parent=1 // loop_body
      %s29 = ssub.s32 %s24, 1
      %s30 = ssub.s32 %s24, 2
      %s37 = sadd.s32 1, %s32
      %p38 = scmp.ge.s32.totalorder %s37, 1
      %s39 = scalar_select %p38, 0, %s37
      %s40 = sadd.s32 1, %s31
      %s41 = scalar_select %p38, %s40, %s31
      %p42 = scmp.ge.s32.totalorder %s41, 2
      %s43 = scalar_select %p42, 0, %s41
      %s44 = sld [smem:[#allocation3 + %s31]]
      %s45 = sadd.s32 %s44, %s32
      %p46 = scmp.lt.s32.totalorder %s45, 0
      %s47 = scalar_select %p46, %s45, 0
      %s48 = sld [smem:[#allocation3 + %s43]]
      %s49 = sadd.s32 %s48, %s39
      %p50 = scmp.lt.s32.totalorder %s49, 0
      %s51 = scalar_select %p50, %s49, 0
      %s52 = ssub.s32 %s47, %s51
      %p53 = scmp.eq.s32.totalorder %s52, 0
      %s55 = sadd.s32 %s54, 1
      %s56 = scalar_select %p53, %s54, %s55
      %p59 = pneg %p53
      %p60 = scmp.eq.s32.totalorder %s24, 1
      %p61 = por %p59, %p60
      %p62 = scmp.ne.s32.totalorder %s54, %s57
      %p63 = scmp.eq.s32.totalorder %s24, 0
      %p64 = por %p62, %p63
      %p65 = scmp.ne.s32.totalorder %s54, %s57
      %p66 = scmp.eq.s32.totalorder %s29, 1
      %p67 = por %p65, %p66
      %p68 = scmp.ne.s32.totalorder %s57, %s58
      %p69 = scmp.eq.s32.totalorder %s29, 0
      %p70 = por %p68, %p69
      %p71 = scmp.ne.s32.totalorder %s57, %s58
      %p72 = scmp.eq.s32.totalorder %s30, 1
      %p73 = por %p71, %p72
      %p75 = scmp.ne.s32.totalorder %s58, %s74
      %p76 = scmp.eq.s32.totalorder %s30, 0
      %p77 = por %p75, %p76
      %s78 = sld [smem:[#allocation3 + %s31]]
      %s79 = sadd.s32 %s78, %s32
      %p80 = scmp.lt.s32.totalorder %s79, 0
      %s81 = scalar_select %p80, %s79, 0
      %s82 = sld [smem:[#allocation3 + %s43]]
      %s83 = sadd.s32 %s82, %s39
      %p84 = scmp.lt.s32.totalorder %s83, 0
      %s85 = scalar_select %p84, %s83, 0
      %s86 = ssub.s32 %s81, %s85
      %p87 = scmp.eq.s32.totalorder %s86, 0
      %s89 = sadd.s32 %s88, 1
      %s90 = scalar_select %p87, %s88, %s89
      %p93 = pneg %p87
      %p94 = scmp.eq.s32.totalorder %s24, 1
      %p95 = por %p93, %p94
      %p96 = scmp.ne.s32.totalorder %s88, %s91
      %p97 = scmp.eq.s32.totalorder %s24, 0
      %p98 = por %p96, %p97
      %p99 = scmp.ne.s32.totalorder %s88, %s91
      %p100 = scmp.eq.s32.totalorder %s29, 1
      %p101 = por %p99, %p100
      %p102 = scmp.ne.s32.totalorder %s91, %s92
      %p103 = scmp.eq.s32.totalorder %s29, 0
      %p104 = por %p102, %p103
      %p105 = scmp.ne.s32.totalorder %s91, %s92
      %p106 = scmp.eq.s32.totalorder %s30, 1
      %p107 = por %p105, %p106
      %p109 = scmp.ne.s32.totalorder %s92, %s108
      %p110 = scmp.eq.s32.totalorder %s30, 0
      %p111 = por %p109, %p110
      %s112 = ssub.s32 %s31, %s43
      %p113 = scmp.eq.s32.totalorder %s112, 0
      %s115 = sadd.s32 %s114, 1
      %s116 = scalar_select %p113, %s114, %s115
      %p119 = pneg %p113
      %p120 = scmp.eq.s32.totalorder %s24, 1
      %p121 = por %p119, %p120
      %p122 = scmp.ne.s32.totalorder %s114, %s117
      %p123 = scmp.eq.s32.totalorder %s24, 0
      %p124 = por %p122, %p123
      %p125 = scmp.ne.s32.totalorder %s114, %s117
      %p126 = scmp.eq.s32.totalorder %s29, 1
      %p127 = por %p125, %p126
      %p128 = scmp.ne.s32.totalorder %s117, %s118
      %p129 = scmp.eq.s32.totalorder %s29, 0
      %p130 = por %p128, %p129
      %p131 = scmp.ne.s32.totalorder %s117, %s118
      %p132 = scmp.eq.s32.totalorder %s30, 1
      %p133 = por %p131, %p132
      %p135 = scmp.ne.s32.totalorder %s118, %s134
      %p136 = scmp.eq.s32.totalorder %s30, 0
      %p137 = por %p135, %p136
      %p138 = scmp.le.s32.totalorder 1, %s24
      %p139 = scmp.lt.s32.totalorder %s24, 3
      %p140 = pnand %p138, %p139
      %p141 = pneg %p140
      // Predicated region
      $region9: #{tpu_custom_call.1} parent=5 // pred_check
        _
      $region10: #{tpu_custom_call.1} parent=5 // pred_check_branch
        %143 = sbr.rel (%p140) target = $region12
      $region11: #{tpu_custom_call.1} parent=5 // pred_region
        %s144 = ssub.s32 %s24, 1
      $region12: #{tpu_custom_call.1} parent=5 // pred_fallthru
        _
      %p145 = scmp.lt.s32.totalorder %s24, 2
      // Predicated region
      $region13: #{tpu_custom_call.1} parent=5 // pred_check
        %p146 = pneg %p145
      $region14: #{tpu_custom_call.1} parent=5 // pred_check_branch
        %148 = sbr.rel (%p146) target = $region16
      $region15: #{tpu_custom_call.1} parent=5 // pred_region
        // Predicated region
        $region17: #{tpu_custom_call.1} parent=15 // pred_check
          %p149 = pneg %p64
        $region18: #{tpu_custom_call.1} parent=15 // pred_check_branch
          %151 = sbr.rel (%p149) target = $region20
        $region19: #{tpu_custom_call.1} parent=15 // pred_region
          %s152 = sand.u32 %s54, 1
          %s153 = scalar_lea.sflag [#allocation6], %s152
          %s154 = sand.u32 %s54, 1
          %s155 = smul.addr %s154, 192
          %s156 = scalar_lea.vmem [#allocation5], %s155
          %s157 = sld [smem:[#allocation3 + %s31]]
          %s158 = sadd.s32 %s157, %s32
          %p159 = scmp.lt.s32.totalorder %s158, 0
          %s160 = scalar_select %p159, %s158, 0
          %s161 = smul.u32 48, %s160
          %s163 = ssub.s32 3072, 3072
          %164 = vsyncadd %s153, %s163
          %s165 = smul.addr %s161, 64
          %s166 = scalar_lea.hbm %s2, %s165
          %s167 = sshll.u32 %s156, 4
          %s168 = int_to_ptr.vmem [resolvable:$true] %s167
          %173 = dma.hbm_to_vmem [thread:$0]  %s166, 3072, %s168, %s153, 64, 64, 4
        $region20: #{tpu_custom_call.1} parent=15 // pred_fallthru
          _
        // Predicated region
        $region21: #{tpu_custom_call.1} parent=15 // pred_check
          %p174 = pneg %p98
        $region22: #{tpu_custom_call.1} parent=15 // pred_check_branch
          %176 = sbr.rel (%p174) target = $region24
        $region23: #{tpu_custom_call.1} parent=15 // pred_region
          %s177 = sld [smem:[#allocation3 + %s31]]
          %s178 = sadd.s32 %s177, %s32
          %p179 = scmp.lt.s32.totalorder %s178, 0
          %s180 = scalar_select %p179, %s178, 0
          %s181 = smul.u32 3, %s180
          %p182 = scmp.lt.s32.totalorder %s181, 2
          %s183 = scalar_select %p182, %s181, 2
          %s184 = scalar_lea.vmem %s3, %s183
          %s185 = sld [smem:[#allocation3 + %s31]]
          %s186 = sadd.s32 %s185, %s32
          %p187 = scmp.lt.s32.totalorder %s186, 0
          %s188 = scalar_select %p187, %s186, 0
          %s189 = smul.u32 3, %s188
        $region24: #{tpu_custom_call.1} parent=15 // pred_fallthru
          _
      $region16: #{tpu_custom_call.1} parent=5 // pred_fallthru
        _
      %p190 = scmp.le.s32.totalorder 1, %s24
      %p191 = scmp.lt.s32.totalorder %s24, 3
      %p192 = pnand %p190, %p191
      %p193 = pneg %p192
      // Predicated region
      $region25: #{tpu_custom_call.1} parent=5 // pred_check
        _
      $region26: #{tpu_custom_call.1} parent=5 // pred_check_branch
        %195 = sbr.rel (%p192) target = $region28
      $region27: #{tpu_custom_call.1} parent=5 // pred_region
        %s196 = ssub.s32 %s24, 1
        %s197 = sand.u32 %s57, 1
        %s198 = scalar_lea.sflag [#allocation6], %s197
        %s199 = sand.u32 %s57, 1
        %s200 = smul.addr %s199, 192
        %s201 = scalar_lea.vmem [#allocation5], %s200
        // Predicated region
        $region29: #{tpu_custom_call.1} parent=27 // pred_check
          %p202 = pneg %p70
        $region30: #{tpu_custom_call.1} parent=27 // pred_check_branch
          %204 = sbr.rel (%p202) target = $region32
        $region31: #{tpu_custom_call.1} parent=27 // pred_region
          %205 = dma.done %s198, 3072
        $region32: #{tpu_custom_call.1} parent=27 // pred_fallthru
          _
        %s206 = sand.u32 %s57, 1
        %s207 = scalar_lea.sflag [#allocation6], %s206
        %s208 = sand.u32 %s57, 1
        %s209 = smul.addr %s208, 192
        %s210 = scalar_lea.vmem [#allocation5], %s209
        %p211 = pneg %p70
        %p212 = pneg %p67
        %s213 = sld [smem:[#allocation3 + %s33]]
        %s214 = sadd.s32 %s213, %s34
        %p215 = scmp.lt.s32.totalorder %s214, 0
        %s216 = scalar_select %p215, %s214, 0
        %s217 = smul.u32 3, %s216
        %p218 = scmp.lt.s32.totalorder %s217, 2
        %s219 = scalar_select %p218, %s217, 2
        %s220 = scalar_lea.vmem %s3, %s219
        %p221 = pneg %p104
        %p222 = pneg %p101
        %p223 = pneg %p130
        %p224 = pneg %p127
        %s225 = sand.u32 %s117, 1
        %s226 = scalar_lea.sflag [#allocation7], %s225
        %s227 = sand.u32 %s117, 1
        %s228 = smul.addr %s227, 8
        %s229 = scalar_lea.vmem [#allocation8], %s228
        %s230 = sld [smem:[#allocation3 + %s33]]
        %s231 = sadd.s32 %s230, %s34
        %p232 = scmp.lt.s32.totalorder %s231, 0
        %s233 = scalar_select %p232, %s231, 0
        %s234 = smul.u32 48, %s233
        %s235 = sld [smem:[#allocation3 + %s33]]
        %s236 = sadd.s32 %s235, %s34
        %p237 = scmp.lt.s32.totalorder %s236, 0
        %s238 = scalar_select %p237, %s236, 0
        %s239 = smul.u32 3, %s238
        %p240 = scmp.lt.s32.totalorder %s239, 2
        %s241 = scalar_select %p240, %s239, 2
        %s242 = scalar_lea.vmem %s3, %s241
        %s243 = sld [smem:[#allocation3 + %s33]]
        %s244 = sadd.s32 %s243, %s34
        %p245 = scmp.lt.s32.totalorder %s244, 0
        %s246 = scalar_select %p245, %s244, 0
        %s247 = smul.u32 3, %s246
        %p249 = scmp.eq.s32.totalorder %s34, 0
        // Predicated region
        $region33: #{tpu_custom_call.1} parent=27 // pred_check
          %p250 = pneg %p249
        $region34: #{tpu_custom_call.1} parent=27 // pred_check_branch
          %252 = sbr.rel (%p250) target = $region36
        $region35: #{tpu_custom_call.1} parent=27 // pred_region
          %253 = vst [vmem:[%s229] sm:$0xff] 0.0
        $region36: #{tpu_custom_call.1} parent=27 // pred_fallthru
          _
        %s254 = sld [smem:[#allocation4 + %s33]]
        %p255 = scmp.lt.s32.totalorder %s34, %s254
        // Predicated region
        $region37: #{tpu_custom_call.1} parent=27 // pred_check
          %p256 = pneg %p255
        $region38: #{tpu_custom_call.1} parent=27 // pred_check_branch
          %258 = sbr.rel (%p256) target = $region40
        $region39: #{tpu_custom_call.1} parent=27 // pred_region
          %v259 = vld [vmem:[%s242] sm:$0x7]
          %s260 = smul.u32 %s33, 8
          %v261 = vstv %s260
          %v262 = vsub.s32 %v259, %v261
          %v263 = vlaneseq
          %v264 = vshrl.u32 %v263, 7
          %v265 = vlaneseq
          %v266 = vshrl.u32 %v265, 7
          %v267 = vsub.s32 0, %v266
          %v268 = vrot.slane %v262, %v267
          %v269 = vlaneseq
          %v270 = vshrl.u32 %v269, 7
          %v271 = vsub.s32 1, %v270
          %v272 = vrot.slane %v262, %v271
          %v273 = vlaneseq
          %v274 = vshrl.u32 %v273, 7
          %v275 = vsub.s32 2, %v274
          %v276 = vrot.slane %v262, %v275
          %vm277 = vcmp.eq.s32.totalorder %v264, %v268
          %vm278 = vcmp.eq.s32.totalorder %v264, %v272
          %vm279 = vcmp.eq.s32.totalorder %v264, %v276
          %v280 = vsel %vm277, 1, 0
          %v281 = vsel %vm278, 1, 0
          %v282 = vsel %vm279, 1, 0
          %v283 = vcvt.s32.f32 %v280
          %v284 = vcvt.s32.f32 %v281
          %v285 = vcvt.s32.f32 %v282
          %v286 = vpack.c.bf16 %v283, %v283
          %v287 = vpack.c.bf16 %v284, %v284
          %v288 = vpack.c.bf16 %v285, %v285
          %v289 = vld [vmem:[%s229] sm:$0xff]
          %v290 = vld [vmem:[%s201] sm:$0xf]
          %v291 = vld [vmem:[%s201 + $0x4] sm:$0xf]
          %v292 = vld [vmem:[%s201 + $0x8] sm:$0xf]
          %v293 = vld [vmem:[%s201 + $0xc] sm:$0xf]
          %v294 = vld [vmem:[%s201 + $0x10] sm:$0xf]
          %v295 = vld [vmem:[%s201 + $0x14] sm:$0xf]
          %v296 = vld [vmem:[%s201 + $0x18] sm:$0xf]
          %v297 = vld [vmem:[%s201 + $0x1c] sm:$0xf]
          %v298 = vld [vmem:[%s201 + $0x20] sm:$0xf]
          %v299 = vld [vmem:[%s201 + $0x24] sm:$0xf]
          %v300 = vld [vmem:[%s201 + $0x28] sm:$0xf]
          %v301 = vld [vmem:[%s201 + $0x2c] sm:$0xf]
          %v302 = vld [vmem:[%s201 + $0x30] sm:$0xf]
          %v303 = vld [vmem:[%s201 + $0x34] sm:$0xf]
          %v304 = vld [vmem:[%s201 + $0x38] sm:$0xf]
          %v305 = vld [vmem:[%s201 + $0x3c] sm:$0xf]
          %v306 = vld [vmem:[%s201 + $0x40] sm:$0xf]
          %v307 = vld [vmem:[%s201 + $0x44] sm:$0xf]
          %v308 = vld [vmem:[%s201 + $0x48] sm:$0xf]
          %v309 = vld [vmem:[%s201 + $0x4c] sm:$0xf]
          %v310 = vld [vmem:[%s201 + $0x50] sm:$0xf]
          %v311 = vld [vmem:[%s201 + $0x54] sm:$0xf]
          %v312 = vld [vmem:[%s201 + $0x58] sm:$0xf]
          %v313 = vld [vmem:[%s201 + $0x5c] sm:$0xf]
          %v314 = vld [vmem:[%s201 + $0x60] sm:$0xf]
          %v315 = vld [vmem:[%s201 + $0x64] sm:$0xf]
          %v316 = vld [vmem:[%s201 + $0x68] sm:$0xf]
          %v317 = vld [vmem:[%s201 + $0x6c] sm:$0xf]
          %v318 = vld [vmem:[%s201 + $0x70] sm:$0xf]
          %v319 = vld [vmem:[%s201 + $0x74] sm:$0xf]
          %v320 = vld [vmem:[%s201 + $0x78] sm:$0xf]
          %v321 = vld [vmem:[%s201 + $0x7c] sm:$0xf]
          %v322 = vld [vmem:[%s201 + $0x80] sm:$0xf]
          %v323 = vld [vmem:[%s201 + $0x84] sm:$0xf]
          %v324 = vld [vmem:[%s201 + $0x88] sm:$0xf]
          %v325 = vld [vmem:[%s201 + $0x8c] sm:$0xf]
          %v326 = vld [vmem:[%s201 + $0x90] sm:$0xf]
          %v327 = vld [vmem:[%s201 + $0x94] sm:$0xf]
          %v328 = vld [vmem:[%s201 + $0x98] sm:$0xf]
          %v329 = vld [vmem:[%s201 + $0x9c] sm:$0xf]
          %v330 = vld [vmem:[%s201 + $0xa0] sm:$0xf]
          %v331 = vld [vmem:[%s201 + $0xa4] sm:$0xf]
          %v332 = vld [vmem:[%s201 + $0xa8] sm:$0xf]
          %v333 = vld [vmem:[%s201 + $0xac] sm:$0xf]
          %v334 = vld [vmem:[%s201 + $0xb0] sm:$0xf]
          %v335 = vld [vmem:[%s201 + $0xb4] sm:$0xf]
          %v336 = vld [vmem:[%s201 + $0xb8] sm:$0xf]
          %v337 = vld [vmem:[%s201 + $0xbc] sm:$0xf]
          %v386 = vunpack.c.l.b16 %v290
          %v387 = vunpack.c.l.b16 %v291
          %v388 = vunpack.c.l.b16 %v292
          %v389 = vunpack.c.l.b16 %v293
          %v390 = vunpack.c.l.b16 %v294
          %v391 = vunpack.c.l.b16 %v295
          %v392 = vunpack.c.l.b16 %v296
          %v393 = vunpack.c.l.b16 %v297
          %v394 = vunpack.c.l.b16 %v298
          %v395 = vunpack.c.l.b16 %v299
          %v396 = vunpack.c.l.b16 %v300
          %v397 = vunpack.c.l.b16 %v301
          %v398 = vunpack.c.l.b16 %v302
          %v399 = vunpack.c.l.b16 %v303
          %v400 = vunpack.c.l.b16 %v304
          %v401 = vunpack.c.l.b16 %v305
          %v402 = vunpack.c.l.b16 %v306
          %v403 = vunpack.c.l.b16 %v307
          %v404 = vunpack.c.l.b16 %v308
          %v405 = vunpack.c.l.b16 %v309
          %v406 = vunpack.c.l.b16 %v310
          %v407 = vunpack.c.l.b16 %v311
          %v408 = vunpack.c.l.b16 %v312
          %v409 = vunpack.c.l.b16 %v313
          %v410 = vunpack.c.l.b16 %v314
          %v411 = vunpack.c.l.b16 %v315
          %v412 = vunpack.c.l.b16 %v316
          %v413 = vunpack.c.l.b16 %v317
          %v414 = vunpack.c.l.b16 %v318
          %v415 = vunpack.c.l.b16 %v319
          %v416 = vunpack.c.l.b16 %v320
          %v417 = vunpack.c.l.b16 %v321
          %v418 = vunpack.c.l.b16 %v322
          %v419 = vunpack.c.l.b16 %v323
          %v420 = vunpack.c.l.b16 %v324
          %v421 = vunpack.c.l.b16 %v325
          %v422 = vunpack.c.l.b16 %v326
          %v423 = vunpack.c.l.b16 %v327
          %v424 = vunpack.c.l.b16 %v328
          %v425 = vunpack.c.l.b16 %v329
          %v426 = vunpack.c.l.b16 %v330
          %v427 = vunpack.c.l.b16 %v331
          %v428 = vunpack.c.l.b16 %v332
          %v429 = vunpack.c.l.b16 %v333
          %v430 = vunpack.c.l.b16 %v334
          %v431 = vunpack.c.l.b16 %v335
          %v432 = vunpack.c.l.b16 %v336
          %v433 = vunpack.c.l.b16 %v337
          %v434 = vpack.c.b16 %v387, %v386
          %v435 = vpack.c.b16 %v389, %v388
          %v436 = vpack.c.b16 %v391, %v390
          %v437 = vpack.c.b16 %v393, %v392
          %v438 = vpack.c.b16 %v395, %v394
          %v439 = vpack.c.b16 %v397, %v396
          %v440 = vpack.c.b16 %v399, %v398
          %v441 = vpack.c.b16 %v401, %v400
          %v442 = vpack.c.b16 %v403, %v402
          %v443 = vpack.c.b16 %v405, %v404
          %v444 = vpack.c.b16 %v407, %v406
          %v445 = vpack.c.b16 %v409, %v408
          %v446 = vpack.c.b16 %v411, %v410
          %v447 = vpack.c.b16 %v413, %v412
          %v448 = vpack.c.b16 %v415, %v414
          %v449 = vpack.c.b16 %v417, %v416
          %v450 = vpack.c.b16 %v419, %v418
          %v451 = vpack.c.b16 %v421, %v420
          %v452 = vpack.c.b16 %v423, %v422
          %v453 = vpack.c.b16 %v425, %v424
          %v454 = vpack.c.b16 %v427, %v426
          %v455 = vpack.c.b16 %v429, %v428
          %v456 = vpack.c.b16 %v431, %v430
          %v457 = vpack.c.b16 %v433, %v432
          %482 = vmatprep.subr.bf16.mxu0 0
          %483 = vmatpush1.bf16.msra.mxu0 %v441
          %484 = vmatprep.subr.bf16.mxu0 0
          %485 = vmatpush1.bf16.msra.mxu0 %v440
          %486 = vmatprep.subr.bf16.mxu0 0
          %487 = vmatpush1.bf16.msra.mxu0 %v439
          %488 = vmatprep.subr.bf16.mxu0 0
          %489 = vmatpush1.bf16.msra.mxu0 %v438
          %490 = vmatprep.subr.bf16.mxu0 0
          %491 = vmatpush1.bf16.msra.mxu0 %v437
          %492 = vmatprep.subr.bf16.mxu0 0
          %493 = vmatpush1.bf16.msra.mxu0 %v436
          %494 = vmatprep.subr.bf16.mxu0 0
          %495 = vmatpush1.bf16.msra.mxu0 %v435
          %496 = vmatprep.subr.bf16.mxu0 0
          %497 = vmatpush1.bf16.msra.mxu0 %v434
          %498 = vmatprep.subr.bf16.mxu0 0
          %499 = vmatpush2.bf16.msra.mxu0 %v449
          %500 = vmatprep.subr.bf16.mxu0 0
          %501 = vmatpush2.bf16.msra.mxu0 %v448
          %502 = vmatprep.subr.bf16.mxu0 0
          %503 = vmatpush2.bf16.msra.mxu0 %v447
          %504 = vmatprep.subr.bf16.mxu0 0
          %505 = vmatpush2.bf16.msra.mxu0 %v446
          %506 = vmatprep.subr.bf16.mxu0 0
          %507 = vmatpush2.bf16.msra.mxu0 %v445
          %508 = vmatprep.subr.bf16.mxu0 0
          %509 = vmatpush2.bf16.msra.mxu0 %v444
          %510 = vmatprep.subr.bf16.mxu0 0
          %511 = vmatpush2.bf16.msra.mxu0 %v443
          %512 = vmatprep.subr.bf16.mxu0 0
          %513 = vmatpush2.bf16.msra.mxu0 %v442
          %514 = vmatprep.mubr.bf16.mxu0 %v287
          %515 = vmatmul.mubr.bf16.gmra.mxu0 %v286
          %v516 = vpop.f32.mrf.mxu0
          %v517 = vadd.f32 0.0, %v516
          %v518 = vpop.f32.mrf.mxu0
          %v519 = vpop.f32.mrf.mxu0
          %v520 = vpop.f32.mrf.mxu0
          %521 = vdwg.mxu0
          %522 = vmatprep.subr.bf16.mxu0 0
          %523 = vmatpush1.bf16.msra.mxu0 %v457
          %524 = vmatprep.subr.bf16.mxu0 0
          %525 = vmatpush1.bf16.msra.mxu0 %v456
          %526 = vmatprep.subr.bf16.mxu0 0
          %527 = vmatpush1.bf16.msra.mxu0 %v455
          %528 = vmatprep.subr.bf16.mxu0 0
          %529 = vmatpush1.bf16.msra.mxu0 %v454
          %530 = vmatprep.subr.bf16.mxu0 0
          %531 = vmatpush1.bf16.msra.mxu0 %v453
          %532 = vmatprep.subr.bf16.mxu0 0
          %533 = vmatpush1.bf16.msra.mxu0 %v452
          %534 = vmatprep.subr.bf16.mxu0 0
          %535 = vmatpush1.bf16.msra.mxu0 %v451
          %536 = vmatprep.subr.bf16.mxu0 0
          %537 = vmatpush1.bf16.msra.mxu0 %v450
          %538 = vmatprep.subr.bf16.mxu0 0
          %539 = vmatpush2.bf16.msra.mxu0 0
          %540 = vmatprep.subr.bf16.mxu0 0
          %541 = vmatpush2.bf16.msra.mxu0 0
          %542 = vmatprep.subr.bf16.mxu0 0
          %543 = vmatpush2.bf16.msra.mxu0 0
          %544 = vmatprep.subr.bf16.mxu0 0
          %545 = vmatpush2.bf16.msra.mxu0 0
          %546 = vmatprep.subr.bf16.mxu0 0
          %547 = vmatpush2.bf16.msra.mxu0 0
          %548 = vmatprep.subr.bf16.mxu0 0
          %549 = vmatpush2.bf16.msra.mxu0 0
          %550 = vmatprep.subr.bf16.mxu0 0
          %551 = vmatpush2.bf16.msra.mxu0 0
          %552 = vmatprep.subr.bf16.mxu0 0
          %553 = vmatpush2.bf16.msra.mxu0 0
          %554 = vmatprep.mubr.bf16.mxu0 0
          %555 = vmatmul.mubr.bf16.gmra.mxu0 %v288
          %v556 = vpop.f32.mrf.mxu0
          %v557 = vadd.f32 %v517, %v556
          %v558 = vpop.f32.mrf.mxu0
          %v559 = vpop.f32.mrf.mxu0
          %v560 = vpop.f32.mrf.mxu0
          %561 = vdwg.mxu0
          %v562 = vadd.f32 %v289, %v557
          %563 = vst [vmem:[%s229] sm:$0xff] %v562
        $region40: #{tpu_custom_call.1} parent=27 // pred_fallthru
          _
        %s564 = sand.u32 %s117, 1
        %s565 = scalar_lea.sflag [#allocation7], %s564
        %s566 = sand.u32 %s117, 1
        %s567 = smul.addr %s566, 8
        %s568 = scalar_lea.vmem [#allocation8], %s567
        // Predicated region
        $region41: #{tpu_custom_call.1} parent=27 // pred_check
          %p569 = pneg %p127
        $region42: #{tpu_custom_call.1} parent=27 // pred_check_branch
          %571 = sbr.rel (%p569) target = $region44
        $region43: #{tpu_custom_call.1} parent=27 // pred_region
          %s573 = ssub.s32 128, 128
          %574 = vsyncadd %s565, %s573
          %s575 = smul.addr %s33, 128
          %s576 = scalar_lea.hbm %s4, %s575
          %s578 = sshll.u32 %s568, 4
          %s579 = int_to_ptr.vmem [resolvable:$true] %s578
          %581 = dma.vmem_to_hbm [thread:$0]  %s579, 128, %s576, %s565
        $region44: #{tpu_custom_call.1} parent=27 // pred_fallthru
          _
      $region28: #{tpu_custom_call.1} parent=5 // pred_fallthru
        _
      %p582 = scmp.le.s32.totalorder 2, %s24
      // Predicated region
      $region45: #{tpu_custom_call.1} parent=5 // pred_check
        %p583 = pneg %p582
      $region46: #{tpu_custom_call.1} parent=5 // pred_check_branch
        %585 = sbr.rel (%p583) target = $region48
      $region47: #{tpu_custom_call.1} parent=5 // pred_region
        %s586 = ssub.s32 %s24, 2
        // Predicated region
        $region49: #{tpu_custom_call.1} parent=47 // pred_check
          %p587 = pneg %p133
        $region50: #{tpu_custom_call.1} parent=47 // pred_check_branch
          %589 = sbr.rel (%p587) target = $region52
        $region51: #{tpu_custom_call.1} parent=47 // pred_region
          %s590 = sand.u32 %s118, 1
          %s591 = scalar_lea.sflag [#allocation7], %s590
          %s592 = sand.u32 %s118, 1
          %s593 = smul.addr %s592, 8
          %s594 = scalar_lea.vmem [#allocation8], %s593
          %595 = dma.done %s591, 128
        $region52: #{tpu_custom_call.1} parent=47 // pred_fallthru
          _
      $region48: #{tpu_custom_call.1} parent=5 // pred_fallthru
        _
    $region6: #{tpu_custom_call.1} parent=1 // loop_footer
      %s28 = sadd.s32 1, %s24
    $region7: #{tpu_custom_call.1} parent=1 // loop_footer_branch
      %23 = sbr.rel target = $region3
    $region8: #{tpu_custom_call.1} parent=1 // loop_exit
      _
    %596 = vsyncpa [#allocation6], 1
    %s597 = scalar_lea.sflag [#allocation6], 1
    %598 = vsyncpa %s597, 1
    %599 = vsyncpa [#allocation7], 1
    %s600 = scalar_lea.sflag [#allocation7], 1
    %601 = vsyncpa %s600, 1

</llo_original>
